<compile_context>
chip_gen: v7x
topology: tpu7x:2x2x1
jax: 0.10.0
libtpu: 0.0.40
codegen_flags: <defaults>
</compile_context>

<pallas_src>
import functools

import jax
import jax.numpy as jnp
from jax.experimental import pallas as pl
from jax.experimental.pallas import tpu as pltpu


def _ftl_kernel(x_ref, t_ref, o_ref, *, hw, lane_tile, n_ki, num_classes, need_mask):
    """One (batch n, pixel-chunk ko, inner-chunk ki) grid step.

    x_ref : (C, T) logits, t_ref : (1, T) integer labels,
    o_ref : (3, T) resident accumulator -> rows [tp, sum(p), #in-range labels].
    """
    ki = pl.program_id(2)
    kc = pl.program_id(1) * n_ki + ki          # global pixel-chunk index

    @pl.when(ki == 0)
    def _():
        o_ref[...] = jnp.zeros_like(o_ref)

    x = x_ref[...].astype(jnp.float32)         # widen bf16 logits in-kernel (no-op for f32)
    t = t_ref[...].astype(jnp.int32)           # widen narrow integer labels in-kernel

    # Single EUP push: sigmoid(x) = 0.5*tanh(0.5*x) + 0.5.
    p = 0.5 * jnp.tanh(0.5 * x) + 0.5

    # Per-channel one-hot contribution, then a cheap sublane (XLU) reduce so only
    # (1, T)-wide quantities are accumulated (scratch-free, C-independent VMEM).
    c_idx = jax.lax.broadcasted_iota(jnp.int32, p.shape, 0)
    tp_lane = jnp.sum(jnp.where(t == c_idx, p, 0.0), axis=0, keepdims=True)   # (1, T)
    p_lane = jnp.sum(p, axis=0, keepdims=True)                                # (1, T)
    # #pixels whose label is in [0, C): exact sum(onehot) even with ignore labels.
    cnt_lane = ((t >= 0) & (t < num_classes)).astype(jnp.float32)             # (1, T)

    if need_mask:
        # Partial last pixel chunk: the block DMA ran past H*W; zero the OOB lanes.
        # Keep these as selects -- NaN from garbage logits must not leak via 0*NaN.
        lane = jax.lax.broadcasted_iota(jnp.int32, (1, lane_tile), 1)
        valid = (kc * lane_tile + lane) < hw
        tp_lane = jnp.where(valid, tp_lane, 0.0)
        p_lane = jnp.where(valid, p_lane, 0.0)
        cnt_lane = jnp.where(valid, cnt_lane, 0.0)

    o_ref[...] += jnp.concatenate([tp_lane, p_lane, cnt_lane], axis=0)


def focal_tversky_loss2(inputs, targets, smooth=1.0, alpha=0.5, beta=0.5,
                        gamma=0.5, target_block_bytes=2 << 20, max_lane_tile=65536):
    """inputs: (N, C, H, W) float logits; targets: (N, H, W) integer class labels.
    Out-of-range labels (e.g. ignore-index 255) behave exactly as in the PyTorch
    reference (all-zero one-hot row for that pixel)."""
    N, C, H, W = inputs.shape
    HW = H * W

    # Free reshapes only -- no transpose / extra HBM pass.
    x = inputs.reshape(N, C, HW)
    if x.dtype not in (jnp.float32, jnp.bfloat16):
        x = x.astype(jnp.float32)
    t = targets.reshape(N, 1, HW)
    if (not jnp.issubdtype(t.dtype, jnp.integer)) or t.dtype.itemsize > 4:
        t = t.astype(jnp.int32)

    # Lane-tile: ~target_block_bytes of logits per grid step (amortizes the ~0.35us
    # per-step pipeline cost), multiple of 128, capped so worst-case VMEM (double-
    # buffered logits + labels + resident output block) stays well under the 32 MiB
    # default scoped limit on every generation (incl. v7x's 64 MiB physical VMEM).
    itemsize = jnp.dtype(x.dtype).itemsize
    lane_tile = (int(target_block_bytes) // max(1, C * itemsize)) // 128 * 128
    lane_tile = max(128, min(lane_tile, int(max_lane_tile)))
    if HW <= lane_tile:
        lane_tile = HW            # whole image in one small block (always legal)
    n_k = pl.cdiv(HW, lane_tile)
    need_mask = (HW % lane_tile) != 0

    # Second *parallel* grid axis over pixel chunks keeps both v7x TensorCores busy
    # when N is small. Only divisors of n_k are used so no block is fully OOB.
    n_ko = 1
    if N < 4 and n_k > 1:
        for d in (4, 3, 2):
            if d <= n_k and n_k % d == 0:
                n_ko = d
                break
    n_ki = n_k // n_ko

    kernel = functools.partial(
        _ftl_kernel, hw=HW, lane_tile=lane_tile, n_ki=n_ki,
        num_classes=C, need_mask=need_mask)

    grid_spec = pltpu.PrefetchScalarGridSpec(
        num_scalar_prefetch=0,
        grid=(N, n_ko, n_ki),
        in_specs=[
            pl.BlockSpec((pl.Squeezed(), C, lane_tile),
                         lambda n, ko, ki: (n, 0, ko * n_ki + ki)),
            pl.BlockSpec((pl.Squeezed(), 1, lane_tile),
                         lambda n, ko, ki: (n, 0, ko * n_ki + ki)),
        ],
        out_specs=pl.BlockSpec((pl.Squeezed(), pl.Squeezed(), 3, lane_tile),
                               lambda n, ko, ki: (n, ko, 0, 0)),
    )

    part = pl.pallas_call(
        kernel,
        out_shape=jax.ShapeDtypeStruct((N, n_ko, 3, lane_tile), jnp.float32),
        grid_spec=grid_spec,
        compiler_params=pltpu.CompilerParams(
            dimension_semantics=("parallel", "parallel", "arbitrary")),
    )(x, t)

    # Tiny epilogue in JAX: one cross-lane reduce over all lane-dense partials,
    # then the scalar tversky math (fp/fn derived algebraically from tp/sum(p)).
    sums = jnp.sum(part, axis=(0, 1, 3))             # (3,) = [tp, sum(p), sum(onehot)]
    tp, sum_p, n_pos = sums[0], sums[1], sums[2]
    fp = sum_p - tp                                   # sum((1-onehot)*p) = sum(p) - tp
    fn = n_pos - tp                                   # sum(onehot*(1-p)) = sum(onehot) - tp
    tversky = (tp + smooth) / (tp + alpha * fp + beta * fn + smooth)
    return jnp.maximum(1.0 - tversky, 0.0) ** gamma   # clamp FP noise before x**0.5


def _reference(inputs, targets, smooth=1.0, alpha=0.5, beta=0.5, gamma=0.5):
    N, C, H, W = inputs.shape
    onehot = jax.nn.one_hot(targets, C, axis=1, dtype=jnp.float32)  # 0-row for OOR labels
    p = jax.nn.sigmoid(inputs.astype(jnp.float32)).reshape(-1)
    o = onehot.reshape(-1)
    tp = jnp.sum(p * o)
    fp = jnp.sum((1.0 - o) * p)
    fn = jnp.sum(o * (1.0 - p))
    tversky = (tp + smooth) / (tp + alpha * fp + beta * fn + smooth)
    return (1.0 - tversky) ** gamma


if __name__ == "__main__":
    key = jax.random.PRNGKey(0)
    k1, k2, k3, k4 = jax.random.split(key, 4)

    # Test 1: shapes from the module spec (N=2, C=4, H=W=16), 128-aligned spatial size.
    N, C, H, W = 2, 4, 16, 16
    inputs = jax.random.normal(k1, (N, C, H, W), dtype=jnp.float32)
    targets = jax.random.randint(k2, (N, H, W), 0, C, dtype=jnp.int32)
    loss = focal_tversky_loss2(inputs, targets)
    jax.block_until_ready(loss)
    ref = _reference(inputs, targets)
    assert jnp.allclose(loss, ref, rtol=1e-5, atol=1e-5), (loss, ref)

    # Test 2: non-128-aligned spatial size, narrow uint8 labels, an out-of-range
    # "ignore" label, and a tiny block budget to force the masked multi-chunk +
    # second-parallel-axis path.
    N2, C2, H2, W2 = 1, 3, 18, 17
    inputs2 = jax.random.normal(k3, (N2, C2, H2, W2), dtype=jnp.float32)
    targets2 = jax.random.randint(k4, (N2, H2, W2), 0, C2, dtype=jnp.int32)
    targets2 = jnp.where(targets2 == 0, 200, targets2).astype(jnp.uint8)  # ignore label
    loss2 = focal_tversky_loss2(inputs2, targets2, target_block_bytes=2048)
    jax.block_until_ready(loss2)
    ref2 = _reference(inputs2, targets2)
    assert jnp.allclose(loss2, ref2, rtol=1e-5, atol=1e-5), (loss2, ref2)

    print("KERNEL_OK")
</pallas_src>

<mosaic_0001>
module attributes {stable_mosaic.version = 11 : i64} {
  func.func @_ftl_kernel(%arg0: i32, %arg1: i32, %arg2: i32, %arg3: memref<1x4x256xf32, #tpu.memory_space<vmem>>, %arg4: memref<1x1x256xi32, #tpu.memory_space<vmem>>, %arg5: memref<1x1x3x256xf32, #tpu.memory_space<vmem>>) attributes {dimension_semantics = [#tpu.dimension_semantics<parallel>, #tpu.dimension_semantics<parallel>, #tpu.dimension_semantics<arbitrary>], iteration_bounds = array<i64: 2, 1, 1>, scalar_prefetch = 0 : i64, scratch_operands = 0 : i64, tpu.core_type = #tpu.core_type<tc>, window_params = [{transform_indices = @transform_0, window_bounds = array<i64: 1, 4, 256>}, {transform_indices = @transform_1, window_bounds = array<i64: 1, 1, 256>}, {transform_indices = @transform_2, window_bounds = array<i64: 1, 1, 3, 256>}]} {
    %c0_i32 = arith.constant 0 : i32
    %0 = arith.cmpi eq, %arg2, %c0_i32 : i32
    %1 = arith.extui %0 : i1 to i32
    %c0_i32_0 = arith.constant 0 : i32
    %2 = arith.cmpi ne, %1, %c0_i32_0 : i32
    scf.if %2 {
      %cst_20 = arith.constant 0.000000e+00 : f32
      %37 = vector.broadcast %cst_20 : f32 to vector<3x256xf32>
      %c0_21 = arith.constant 0 : index
      %c0_22 = arith.constant 0 : index
      %c0_23 = arith.constant 0 : index
      %c0_24 = arith.constant 0 : index
      %38 = vector.load %arg5[%c0_21, %c0_22, %c0_23, %c0_24] : memref<1x1x3x256xf32, #tpu.memory_space<vmem>>, vector<1x1x3x256xf32>
      %39 = vector.shape_cast %38 : vector<1x1x3x256xf32> to vector<3x256xf32>
      %40 = vector.shape_cast %37 : vector<3x256xf32> to vector<1x1x3x256xf32>
      tpu.vector_store %arg5[%c0_21, %c0_22, %c0_23, %c0_24], %40 {strides = array<i32>} : memref<1x1x3x256xf32, #tpu.memory_space<vmem>>, vector<1x1x3x256xf32>,
    } else {
    }
    %c0 = arith.constant 0 : index
    %c0_1 = arith.constant 0 : index
    %c0_2 = arith.constant 0 : index
    %3 = vector.load %arg3[%c0, %c0_1, %c0_2] : memref<1x4x256xf32, #tpu.memory_space<vmem>>, vector<1x4x256xf32>
    %4 = vector.shape_cast %3 : vector<1x4x256xf32> to vector<4x256xf32>
    %c0_3 = arith.constant 0 : index
    %c0_4 = arith.constant 0 : index
    %c0_5 = arith.constant 0 : index
    %5 = vector.load %arg4[%c0_3, %c0_4, %c0_5] : memref<1x1x256xi32, #tpu.memory_space<vmem>>, vector<1x1x256xi32>
    %6 = vector.shape_cast %5 : vector<1x1x256xi32> to vector<1x256xi32>
    %cst = arith.constant 5.000000e-01 : f32
    %7 = vector.broadcast %cst : f32 to vector<4x256xf32>
    %8 = arith.mulf %7, %4 : vector<4x256xf32>
    %9 = math.tanh %8 : vector<4x256xf32>
    %cst_6 = arith.constant 5.000000e-01 : f32
    %10 = vector.broadcast %cst_6 : f32 to vector<4x256xf32>
    %11 = arith.mulf %10, %9 : vector<4x256xf32>
    %cst_7 = arith.constant 5.000000e-01 : f32
    %12 = vector.broadcast %cst_7 : f32 to vector<4x256xf32>
    %13 = arith.addf %11, %12 : vector<4x256xf32>
    %14 = tpu.iota {dimensions = array<i32: 0>} : vector<4x256xi32>
    %15 = vector.broadcast %6 : vector<1x256xi32> to vector<4x256xi32>
    %16 = arith.cmpi eq, %15, %14 : vector<4x256xi32>
    %cst_8 = arith.constant 0.000000e+00 : f32
    %17 = vector.broadcast %cst_8 : f32 to vector<4x256xf32>
    %18 = arith.select %16, %13, %17 : vector<4x256xi1>, vector<4x256xf32>
    %cst_9 = arith.constant dense<0.000000e+00> : vector<256xf32>
    %19 = vector.multi_reduction <add>, %18, %cst_9 [0] : vector<4x256xf32> to vector<256xf32>
    %20 = vector.shape_cast %19 : vector<256xf32> to vector<1x256xf32>
    %cst_10 = arith.constant dense<0.000000e+00> : vector<256xf32>
    %21 = vector.multi_reduction <add>, %13, %cst_10 [0] : vector<4x256xf32> to vector<256xf32>
    %22 = vector.shape_cast %21 : vector<256xf32> to vector<1x256xf32>
    %c0_i32_11 = arith.constant 0 : i32
    %23 = vector.broadcast %c0_i32_11 : i32 to vector<1x256xi32>
    %24 = arith.cmpi sge, %6, %23 : vector<1x256xi32>
    %c4_i32 = arith.constant 4 : i32
    %25 = vector.broadcast %c4_i32 : i32 to vector<1x256xi32>
    %26 = arith.cmpi slt, %6, %25 : vector<1x256xi32>
    %27 = arith.andi %24, %26 : vector<1x256xi1>
    %28 = arith.extui %27 : vector<1x256xi1> to vector<1x256xi32>
    %29 = arith.sitofp %28 : vector<1x256xi32> to vector<1x256xf32>
    %c0_12 = arith.constant 0 : index
    %c0_13 = arith.constant 0 : index
    %c0_14 = arith.constant 0 : index
    %c0_15 = arith.constant 0 : index
    %30 = vector.load %arg5[%c0_12, %c0_13, %c0_14, %c0_15] : memref<1x1x3x256xf32, #tpu.memory_space<vmem>>, vector<1x1x3x256xf32>
    %31 = vector.shape_cast %30 : vector<1x1x3x256xf32> to vector<3x256xf32>
    %32 = tpu.concatenate %20, %22, %29 in 0 : vector<1x256xf32>, vector<1x256xf32>, vector<1x256xf32> -> vector<3x256xf32>
    %33 = arith.addf %31, %32 : vector<3x256xf32>
    %c0_16 = arith.constant 0 : index
    %c0_17 = arith.constant 0 : index
    %c0_18 = arith.constant 0 : index
    %c0_19 = arith.constant 0 : index
    %34 = vector.load %arg5[%c0_16, %c0_17, %c0_18, %c0_19] : memref<1x1x3x256xf32, #tpu.memory_space<vmem>>, vector<1x1x3x256xf32>
    %35 = vector.shape_cast %34 : vector<1x1x3x256xf32> to vector<3x256xf32>
    %36 = vector.shape_cast %33 : vector<3x256xf32> to vector<1x1x3x256xf32>
    tpu.vector_store %arg5[%c0_16, %c0_17, %c0_18, %c0_19], %36 {strides = array<i32>} : memref<1x1x3x256xf32, #tpu.memory_space<vmem>>, vector<1x1x3x256xf32>,
    return
  }
  func.func @transform_0(%arg0: i32, %arg1: i32, %arg2: i32) -> (i32, i32, i32) {
    %c1_i32 = arith.constant 1 : i32
    %0 = arith.muli %arg1, %c1_i32 : i32
    %1 = arith.addi %0, %arg2 : i32
    %c0_i32 = arith.constant 0 : i32
    %c0_i32_0 = arith.constant 0 : i32
    return %arg0, %c0_i32, %1 : i32, i32, i32
  }
  func.func @transform_1(%arg0: i32, %arg1: i32, %arg2: i32) -> (i32, i32, i32) {
    %c1_i32 = arith.constant 1 : i32
    %0 = arith.muli %arg1, %c1_i32 : i32
    %1 = arith.addi %0, %arg2 : i32
    %c0_i32 = arith.constant 0 : i32
    %c0_i32_0 = arith.constant 0 : i32
    return %arg0, %c0_i32, %1 : i32, i32, i32
  }
  func.func @transform_2(%arg0: i32, %arg1: i32, %arg2: i32) -> (i32, i32, i32, i32) {
    %c0_i32 = arith.constant 0 : i32
    %c0_i32_0 = arith.constant 0 : i32
    %c0_i32_1 = arith.constant 0 : i32
    return %arg0, %arg1, %c0_i32, %c0_i32_0 : i32, i32, i32, i32
  }
}

</mosaic_0001>

<llo_original>
// kernel: tpu_custom_call.1
$region0: #{tpu_custom_call.1}
  #allocation0 [shape = 'u32[]', space=smem, size = 0x4, offset = 0x4, fixed_abs, tag = 'smem constant byte address 0x4 - core index']
  #allocation1 [shape = 'u32[144,128]{1,0:T(1,128)}', space=vmem, size = 0x12000, scoped, tag = 'internal scratch']
  %s0 = inlined_call_operand.hbm [shape: f32[2,4,256], index: 0, kind: input, shape index: {}]
  %s1 = inlined_call_operand.hbm [shape: s32[2,1,256], index: 1, kind: input, shape index: {}]
  %s2 = inlined_call_operand.vmem [shape: f32[2,1,3,256], index: 2, kind: output, shape index: {}]
  %s3 = sld [smem:[#allocation0]]
  $region53: #{tpu_custom_call.1} parent=0
    _
  %s5 = ssub.s32 1, %s3
  %s6 = scalar_select 0, %s5, %s3
  $region1: #{tpu_custom_call.1} parent=0
    #allocation2 [shape = 'u8[8192]{0}', space=vmem, size = 0x2000, scoped, tag = 'input window, operand 0']
    #allocation3 [shape = 's32[2]{0}', space=sflag, size = 0x8, scoped, tag = 'scoped memory for tpu_custom_call.1']
    #allocation4 [shape = 'u8[2048]{0}', space=vmem, size = 0x800, scoped, tag = 'input window, operand 1']
    #allocation5 [shape = 's32[2]{0}', space=sflag, size = 0x8, scoped, tag = 'scoped memory for tpu_custom_call.1']
    %7 = vsyncpa [#allocation3], 0
    %s8 = scalar_lea.sflag [#allocation3], 1
    %9 = vsyncpa %s8, 0
    %10 = vsyncpa [#allocation5], 0
    %s11 = scalar_lea.sflag [#allocation5], 1
    %12 = vsyncpa %s11, 0
    loop: start=0, step=1, limit=4
    $region2: #{tpu_custom_call.1} parent=1 // loop_pre_header
      _
    $region3: #{tpu_custom_call.1} parent=1 // loop_header
      %s14 = sphi 0, %s18
      %p15 = scmp.ge.s32.totalorder %s14, 4
      %s21 = sphi 0, %s40
      %s22 = sphi 0, %s36
      %s23 = sphi 0, %s32
      %s24 = sphi 0, %s21
      %s25 = sphi 0, %s22
      %s26 = sphi 0, %s23
      %s27 = sphi 0, %s24
      %s28 = sphi 0, %s25
      %s29 = sphi 0, %s26
      %s47 = sphi 0, %s49
      %s50 = sphi 0, %s47
      %s51 = sphi 0, %s50
      %s67 = sphi 0, %s51
      %s77 = sphi 0, %s79
      %s80 = sphi 0, %s77
      %s81 = sphi 0, %s80
      %s97 = sphi 0, %s81
      %s105 = sphi 0, %s107
      %s108 = sphi 0, %s105
      %s109 = sphi 0, %s108
      %s125 = sphi 0, %s109
    $region4: #{tpu_custom_call.1} parent=1 // loop_header_branch
      %17 = sbr.rel (%p15) target = $region8
    $region5: #{tpu_custom_call.1} parent=1 // loop_body
      %s19 = ssub.s32 %s14, 1
      %s20 = ssub.s32 %s14, 2
      %s30 = sadd.s32 1, %s23
      %p31 = scmp.ge.s32.totalorder %s30, 1
      %s32 = scalar_select %p31, 0, %s30
      %s33 = sadd.s32 1, %s22
      %s34 = scalar_select %p31, %s33, %s22
      %p35 = scmp.ge.s32.totalorder %s34, 1
      %s36 = scalar_select %p35, 0, %s34
      %s37 = sadd.s32 1, %s21
      %s38 = scalar_select %p35, %s37, %s21
      %p39 = scmp.ge.s32.totalorder %s38, 2
      %s40 = scalar_select %p39, 0, %s38
      %s41 = sadd.s32 %s22, %s23
      %s42 = sadd.s32 %s36, %s32
      %s43 = ssub.s32 %s21, %s40
      %s44 = ssub.s32 %s41, %s42
      %s45 = sor.u32 %s43, %s44
      %p46 = scmp.eq.s32.totalorder %s45, 0
      %s48 = sadd.s32 %s47, 1
      %s49 = scalar_select %p46, %s47, %s48
      %p52 = pneg %p46
      %p53 = scmp.eq.s32.totalorder %s14, 1
      %p54 = por %p52, %p53
      %p55 = scmp.ne.s32.totalorder %s47, %s50
      %p56 = scmp.eq.s32.totalorder %s14, 0
      %p57 = por %p55, %p56
      %p58 = scmp.ne.s32.totalorder %s47, %s50
      %p59 = scmp.eq.s32.totalorder %s19, 1
      %p60 = por %p58, %p59
      %p61 = scmp.ne.s32.totalorder %s50, %s51
      %p62 = scmp.eq.s32.totalorder %s19, 0
      %p63 = por %p61, %p62
      %p64 = scmp.ne.s32.totalorder %s50, %s51
      %p65 = scmp.eq.s32.totalorder %s20, 1
      %p66 = por %p64, %p65
      %p68 = scmp.ne.s32.totalorder %s51, %s67
      %p69 = scmp.eq.s32.totalorder %s20, 0
      %p70 = por %p68, %p69
      %s71 = sadd.s32 %s22, %s23
      %s72 = sadd.s32 %s36, %s32
      %s73 = ssub.s32 %s21, %s40
      %s74 = ssub.s32 %s71, %s72
      %s75 = sor.u32 %s73, %s74
      %p76 = scmp.eq.s32.totalorder %s75, 0
      %s78 = sadd.s32 %s77, 1
      %s79 = scalar_select %p76, %s77, %s78
      %p82 = pneg %p76
      %p83 = scmp.eq.s32.totalorder %s14, 1
      %p84 = por %p82, %p83
      %p85 = scmp.ne.s32.totalorder %s77, %s80
      %p86 = scmp.eq.s32.totalorder %s14, 0
      %p87 = por %p85, %p86
      %p88 = scmp.ne.s32.totalorder %s77, %s80
      %p89 = scmp.eq.s32.totalorder %s19, 1
      %p90 = por %p88, %p89
      %p91 = scmp.ne.s32.totalorder %s80, %s81
      %p92 = scmp.eq.s32.totalorder %s19, 0
      %p93 = por %p91, %p92
      %p94 = scmp.ne.s32.totalorder %s80, %s81
      %p95 = scmp.eq.s32.totalorder %s20, 1
      %p96 = por %p94, %p95
      %p98 = scmp.ne.s32.totalorder %s81, %s97
      %p99 = scmp.eq.s32.totalorder %s20, 0
      %p100 = por %p98, %p99
      %s101 = ssub.s32 %s21, %s40
      %s102 = ssub.s32 %s22, %s36
      %s103 = sor.u32 %s101, %s102
      %p104 = scmp.eq.s32.totalorder %s103, 0
      %s106 = sadd.s32 %s105, 1
      %s107 = scalar_select %p104, %s105, %s106
      %p110 = pneg %p104
      %p111 = scmp.eq.s32.totalorder %s14, 1
      %p112 = por %p110, %p111
      %p113 = scmp.ne.s32.totalorder %s105, %s108
      %p114 = scmp.eq.s32.totalorder %s14, 0
      %p115 = por %p113, %p114
      %p116 = scmp.ne.s32.totalorder %s105, %s108
      %p117 = scmp.eq.s32.totalorder %s19, 1
      %p118 = por %p116, %p117
      %p119 = scmp.ne.s32.totalorder %s108, %s109
      %p120 = scmp.eq.s32.totalorder %s19, 0
      %p121 = por %p119, %p120
      %p122 = scmp.ne.s32.totalorder %s108, %s109
      %p123 = scmp.eq.s32.totalorder %s20, 1
      %p124 = por %p122, %p123
      %p126 = scmp.ne.s32.totalorder %s109, %s125
      %p127 = scmp.eq.s32.totalorder %s20, 0
      %p128 = por %p126, %p127
      %p129 = scmp.le.s32.totalorder 1, %s14
      %p130 = scmp.lt.s32.totalorder %s14, 3
      %p131 = pnand %p129, %p130
      %p132 = pneg %p131
      // Predicated region
      $region9: #{tpu_custom_call.1} parent=5 // pred_check
        _
      $region10: #{tpu_custom_call.1} parent=5 // pred_check_branch
        %134 = sbr.rel (%p131) target = $region12
      $region11: #{tpu_custom_call.1} parent=5 // pred_region
        %s135 = ssub.s32 %s14, 1
      $region12: #{tpu_custom_call.1} parent=5 // pred_fallthru
        _
      %p136 = scmp.lt.s32.totalorder %s14, 2
      // Predicated region
      $region13: #{tpu_custom_call.1} parent=5 // pred_check
        %p137 = pneg %p136
      $region14: #{tpu_custom_call.1} parent=5 // pred_check_branch
        %139 = sbr.rel (%p137) target = $region16
      $region15: #{tpu_custom_call.1} parent=5 // pred_region
        // Predicated region
        $region17: #{tpu_custom_call.1} parent=15 // pred_check
          %p140 = pneg %p57
        $region18: #{tpu_custom_call.1} parent=15 // pred_check_branch
          %142 = sbr.rel (%p140) target = $region20
        $region19: #{tpu_custom_call.1} parent=15 // pred_region
          %s143 = sand.u32 %s47, 1
          %s144 = scalar_lea.sflag [#allocation3], %s143
          %s145 = sand.u32 %s47, 1
          %s146 = smul.addr %s145, 8
          %s147 = scalar_lea.vmem [#allocation2], %s146
          %s148 = sadd.s32 %s22, %s23
          %s149 = smul.u32 2, %s148
          %s151 = ssub.s32 128, 128
          %152 = vsyncadd %s144, %s151
          %s153 = smul.addr %s21, 2
          %s154 = sadd.s32 %s149, %s153
          %s155 = smul.addr %s154, 64
          %s156 = scalar_lea.hbm %s0, %s155
          %s158 = sshll.u32 %s147, 4
          %s159 = int_to_ptr.vmem [resolvable:$true] %s158
          %161 = dma.hbm_to_vmem [thread:$0]  %s156, 128, %s159, %s144
        $region20: #{tpu_custom_call.1} parent=15 // pred_fallthru
          _
        // Predicated region
        $region21: #{tpu_custom_call.1} parent=15 // pred_check
          %p162 = pneg %p87
        $region22: #{tpu_custom_call.1} parent=15 // pred_check_branch
          %164 = sbr.rel (%p162) target = $region24
        $region23: #{tpu_custom_call.1} parent=15 // pred_region
          %s165 = sand.u32 %s77, 1
          %s166 = scalar_lea.sflag [#allocation5], %s165
          %s167 = sand.u32 %s77, 1
          %s168 = smul.addr %s167, 2
          %s169 = scalar_lea.vmem [#allocation4], %s168
          %s170 = sadd.s32 %s22, %s23
          %s171 = smul.u32 2, %s170
          %s173 = ssub.s32 32, 32
          %174 = vsyncadd %s166, %s173
          %s175 = smul.addr %s21, 2
          %s176 = sadd.s32 %s171, %s175
          %s177 = smul.addr %s176, 16
          %s178 = scalar_lea.hbm %s1, %s177
          %s180 = sshll.u32 %s169, 4
          %s181 = int_to_ptr.vmem [resolvable:$true] %s180
          %183 = dma.hbm_to_vmem [thread:$0]  %s178, 32, %s181, %s166
        $region24: #{tpu_custom_call.1} parent=15 // pred_fallthru
          _
      $region16: #{tpu_custom_call.1} parent=5 // pred_fallthru
        _
      %p184 = scmp.le.s32.totalorder 1, %s14
      %p185 = scmp.lt.s32.totalorder %s14, 3
      %p186 = pnand %p184, %p185
      %p187 = pneg %p186
      // Predicated region
      $region25: #{tpu_custom_call.1} parent=5 // pred_check
        _
      $region26: #{tpu_custom_call.1} parent=5 // pred_check_branch
        %189 = sbr.rel (%p186) target = $region28
      $region27: #{tpu_custom_call.1} parent=5 // pred_region
        %s190 = ssub.s32 %s14, 1
        %s191 = sand.u32 %s50, 1
        %s192 = scalar_lea.sflag [#allocation3], %s191
        %s193 = sand.u32 %s50, 1
        %s194 = smul.addr %s193, 8
        %s195 = scalar_lea.vmem [#allocation2], %s194
        // Predicated region
        $region29: #{tpu_custom_call.1} parent=27 // pred_check
          %p196 = pneg %p63
        $region30: #{tpu_custom_call.1} parent=27 // pred_check_branch
          %198 = sbr.rel (%p196) target = $region32
        $region31: #{tpu_custom_call.1} parent=27 // pred_region
          %199 = dma.done %s192, 128
        $region32: #{tpu_custom_call.1} parent=27 // pred_fallthru
          _
        %s200 = sand.u32 %s80, 1
        %s201 = scalar_lea.sflag [#allocation5], %s200
        %s202 = sand.u32 %s80, 1
        %s203 = smul.addr %s202, 2
        %s204 = scalar_lea.vmem [#allocation4], %s203
        // Predicated region
        $region33: #{tpu_custom_call.1} parent=27 // pred_check
          %p205 = pneg %p93
        $region34: #{tpu_custom_call.1} parent=27 // pred_check_branch
          %207 = sbr.rel (%p205) target = $region36
        $region35: #{tpu_custom_call.1} parent=27 // pred_region
          %208 = dma.done %s201, 32
        $region36: #{tpu_custom_call.1} parent=27 // pred_fallthru
          _
        %s209 = sand.u32 %s50, 1
        %s210 = scalar_lea.sflag [#allocation3], %s209
        %s211 = sand.u32 %s50, 1
        %s212 = smul.addr %s211, 8
        %s213 = scalar_lea.vmem [#allocation2], %s212
        %p214 = pneg %p63
        %p215 = pneg %p60
        %s216 = sand.u32 %s80, 1
        %s217 = scalar_lea.sflag [#allocation5], %s216
        %s218 = sand.u32 %s80, 1
        %s219 = smul.addr %s218, 2
        %s220 = scalar_lea.vmem [#allocation4], %s219
        %p221 = pneg %p93
        %p222 = pneg %p90
        %p223 = pneg %p121
        %p224 = pneg %p118
        %p225 = scmp.lt.s32.totalorder %s24, 1
        %s226 = scalar_select %p225, %s24, 1
        %p227 = scmp.lt.s32.totalorder %s25, 0
        %s228 = scalar_select %p227, %s25, 0
        %s229 = smul.addr %s228, 2
        %s230 = smul.addr %s226, 2
        %s231 = sadd.s32 %s229, %s230
        %s232 = smul.addr %s231, 4
        %s233 = scalar_lea.vmem %s2, %s232
        %s234 = sadd.s32 %s25, %s26
        %s235 = smul.u32 2, %s234
        %s236 = sadd.s32 %s25, %s26
        %s237 = smul.u32 2, %s236
        %p238 = scmp.lt.s32.totalorder %s24, 1
        %s239 = scalar_select %p238, %s24, 1
        %p240 = scmp.lt.s32.totalorder %s25, 0
        %s241 = scalar_select %p240, %s25, 0
        %s242 = smul.addr %s241, 2
        %s243 = smul.addr %s239, 2
        %s244 = sadd.s32 %s242, %s243
        %s245 = smul.addr %s244, 4
        %s246 = scalar_lea.vmem %s2, %s245
        %p247 = scmp.eq.s32.totalorder %s26, 0
        // Predicated region
        $region37: #{tpu_custom_call.1} parent=27 // pred_check
          %p248 = pneg %p247
        $region38: #{tpu_custom_call.1} parent=27 // pred_check_branch
          %250 = sbr.rel (%p248) target = $region40
        $region39: #{tpu_custom_call.1} parent=27 // pred_region
          %251 = vst [vmem:[%s246] sm:$0x77] 0.0
        $region40: #{tpu_custom_call.1} parent=27 // pred_fallthru
          _
        %v252 = vld [vmem:[%s195] sm:$0xff]
        %v253 = vld [vmem:[%s204] sm:$0x3]
        %v254 = vmul.f32 %v252, 0.5
        %v255 = vtanh.pop %v254
        %v256 = vmul.f32 %v255, 0.5
        %v257 = vadd.f32 %v256, 0.5
        %v258 = vlaneseq
        %v259 = vshrl.u32 %v258, 7
        %v260 = vlaneseq
        %v261 = vshrl.u32 %v260, 7
        %v262 = vsub.s32 0, %v261
        %v263 = vrot.slane %v253, %v262
        %v264 = vlaneseq
        %v265 = vshrl.u32 %v264, 7
        %v266 = vsub.s32 1, %v265
        %v267 = vrot.slane %v253, %v266
        %vm268 = vcmp.eq.s32.totalorder %v263, %v259
        %vm269 = vcmp.eq.s32.totalorder %v267, %v259
        %v271 = vcombine.high %v257, %v257
        %v273 = vsel %vm268, %v257, 0.0
        %v274 = vsel %vm269, %v271, 0.0
        %vm275 = vcmask 1043456
        %v276 = vsel %vm275, %v273, 0.0
        %v277 = vrot.slane %v276, 4
        %v278 = vadd.f32 %v276, %v277
        %v279 = vrot.slane %v278, 2
        %v280 = vadd.f32 %v278, %v279
        %v281 = vrot.slane %v280, 1
        %v282 = vadd.f32 %v280, %v281
        %v283 = vsel %vm275, %v274, 0.0
        %v284 = vrot.slane %v283, 4
        %v285 = vadd.f32 %v283, %v284
        %v286 = vrot.slane %v285, 2
        %v287 = vadd.f32 %v285, %v286
        %v288 = vrot.slane %v287, 1
        %v289 = vadd.f32 %v287, %v288
        %v290 = vsel %vm275, %v257, 0.0
        %v291 = vrot.slane %v290, 4
        %v292 = vadd.f32 %v290, %v291
        %v293 = vrot.slane %v292, 2
        %v294 = vadd.f32 %v292, %v293
        %v295 = vrot.slane %v294, 1
        %v296 = vadd.f32 %v294, %v295
        %v297 = vsel %vm275, %v271, 0.0
        %v298 = vrot.slane %v297, 4
        %v299 = vadd.f32 %v297, %v298
        %v300 = vrot.slane %v299, 2
        %v301 = vadd.f32 %v299, %v300
        %v302 = vrot.slane %v301, 1
        %v303 = vadd.f32 %v301, %v302
        %vm304 = vcmp.ge.s32.totalorder %v253, 0
        %vm305 = vcmp.lt.s32.totalorder %v253, 4
        %vm306 = vmand %vm304, %vm305
        %v307 = vsel %vm306, 1, 0
        %v308 = vcvt.s32.f32 %v307
        %v309 = vld [vmem:[%s246] sm:$0x77]
        %v311 = vlaneseq
        %v312 = vshrl.u32 %v311, 7
        %v313 = vsub.s32 0, %v312
        %v314 = vrot.slane %v308, %v313
        %v315 = vlaneseq
        %v316 = vshrl.u32 %v315, 7
        %v317 = vsub.s32 1, %v316
        %v318 = vrot.slane %v308, %v317
        %vm321 = vcmask 1040384
        %v322 = vsel %vm321, %v282, %v296
        %v323 = vsel %vm321, %v289, %v303
        %vm324 = vcmask 1041408
        %v325 = vsel %vm324, %v322, %v314
        %v326 = vsel %vm324, %v323, %v318
        %v329 = vcombine.low %v325, %v326
        %v331 = vadd.f32 %v309, %v329
        %332 = vst [vmem:[%s246] sm:$0x77] %v331
        %p333 = scmp.lt.s32.totalorder %s24, 1
        %s334 = scalar_select %p333, %s24, 1
        %p335 = scmp.lt.s32.totalorder %s25, 0
        %s336 = scalar_select %p335, %s25, 0
        %s337 = smul.addr %s336, 2
        %s338 = smul.addr %s334, 2
        %s339 = sadd.s32 %s337, %s338
        %s340 = smul.addr %s339, 4
        %s341 = scalar_lea.vmem %s2, %s340
        // Predicated region
        $region41: #{tpu_custom_call.1} parent=27 // pred_check
          %p342 = pneg %p118
        $region42: #{tpu_custom_call.1} parent=27 // pred_check_branch
          %344 = sbr.rel (%p342) target = $region44
        $region43: #{tpu_custom_call.1} parent=27 // pred_region
          _
        $region44: #{tpu_custom_call.1} parent=27 // pred_fallthru
          _
      $region28: #{tpu_custom_call.1} parent=5 // pred_fallthru
        _
      %p345 = scmp.le.s32.totalorder 2, %s14
      // Predicated region
      $region45: #{tpu_custom_call.1} parent=5 // pred_check
        %p346 = pneg %p345
      $region46: #{tpu_custom_call.1} parent=5 // pred_check_branch
        %348 = sbr.rel (%p346) target = $region48
      $region47: #{tpu_custom_call.1} parent=5 // pred_region
        %s349 = ssub.s32 %s14, 2
        // Predicated region
        $region49: #{tpu_custom_call.1} parent=47 // pred_check
          %p350 = pneg %p124
        $region50: #{tpu_custom_call.1} parent=47 // pred_check_branch
          %352 = sbr.rel (%p350) target = $region52
        $region51: #{tpu_custom_call.1} parent=47 // pred_region
          %p353 = scmp.lt.s32.totalorder %s27, 1
          %s354 = scalar_select %p353, %s27, 1
          %p355 = scmp.lt.s32.totalorder %s28, 0
          %s356 = scalar_select %p355, %s28, 0
          %s357 = smul.addr %s356, 2
          %s358 = smul.addr %s354, 2
          %s359 = sadd.s32 %s357, %s358
          %s360 = smul.addr %s359, 4
          %s361 = scalar_lea.vmem %s2, %s360
        $region52: #{tpu_custom_call.1} parent=47 // pred_fallthru
          _
      $region48: #{tpu_custom_call.1} parent=5 // pred_fallthru
        _
    $region6: #{tpu_custom_call.1} parent=1 // loop_footer
      %s18 = sadd.s32 1, %s14
    $region7: #{tpu_custom_call.1} parent=1 // loop_footer_branch
      %13 = sbr.rel target = $region3
    $region8: #{tpu_custom_call.1} parent=1 // loop_exit
      _
    %362 = vsyncpa [#allocation3], 1
    %s363 = scalar_lea.sflag [#allocation3], 1
    %364 = vsyncpa %s363, 1
    %365 = vsyncpa [#allocation5], 1
    %s366 = scalar_lea.sflag [#allocation5], 1
    %367 = vsyncpa %s366, 1

</llo_original>
